<compile_context>
chip_gen: v5e
topology: v5e:2x2
jax: 0.10.0
libtpu: 0.0.40
codegen_flags: <defaults>
</compile_context>

<pallas_src>
import functools

import jax
import jax.numpy as jnp
from jax import lax
from jax.experimental import pallas as pl
from jax.experimental.pallas import tpu as pltpu

EPS_PAIRNORM = 1e-5


def _vmem():
    return pl.BlockSpec(memory_space=pltpu.MemorySpace.VMEM)


# ---------------- fully fused MP_GI forward kernel ----------------
def mp_gi_kernel(gdgs_ref, gdstT_ref, dists_ref, bmask_ref, h0_ref,
                 win_ref, bin_ref,
                 wcat_ref, wu2_ref, bpack_ref,
                 w1_ref, b1_ref, w2_ref, b2_ref,
                 out_ref):
    f32 = jnp.float32
    bf16 = jnp.bfloat16
    D = wu2_ref.shape[-1]

    # one-hot operands arrive (and stay) bf16: exact 0/1, native MXU rate.
    gdgs = gdgs_ref[...]       # (E, 2N)  [target one-hot | source one-hot]
    gdT = gdstT_ref[...]       # (N, E)   transposed target one-hot (scatter-add)
    dists = dists_ref[...]     # (E, 1)   precomputed ||pos_i - pos_j||

    # ---- input embedding: h = relu(h0 @ W_in + b_in) ----
    h = jnp.maximum(
        jnp.dot(h0_ref[...], win_ref[...], preferred_element_type=f32)
        + bin_ref[...], 0.0)

    # ---- MP layers (static unroll over stacked per-layer weights) ----
    L = wcat_ref.shape[0]
    for l in range(L):
        b_l = bpack_ref[l]                         # (3, D): [bm ; wmd ; bu]
        bm = b_l[0:1, :]
        wmd = b_l[1:2, :]
        bu = b_l[2:3, :]

        # single fused node-granularity projection: h @ [Wm1 | Wm2 | Wu1]
        hP = jnp.dot(h, wcat_ref[l], preferred_element_type=f32)   # (N, 3D)
        hW1b = hP[:, :D] + bm          # h_i message path, bias folded (exact)
        hW2 = hP[:, D:2 * D]           # h_j message path
        hWu1 = hP[:, 2 * D:]           # update-MLP self path

        # fused edge gather: [gd | gs] @ [hW1b ; hW2], bf16 operands, f32 acc
        hV = jnp.concatenate([hW1b, hW2], axis=0).astype(bf16)     # (2N, D)
        msg = jnp.dot(gdgs, hV, preferred_element_type=f32) + dists * wmd
        msg = jnp.maximum(msg, 0.0)                                 # (E, D)

        # scatter-add over target node == gdst^T @ msg (plain dot, no transpose)
        aggr = jnp.dot(gdT, msg.astype(bf16), preferred_element_type=f32)  # (N, D)

        # update MLP: relu(h @ Wu1 + aggr @ Wu2 + bu)
        upd = jnp.maximum(
            hWu1 + jnp.dot(aggr, wu2_ref[l], preferred_element_type=f32) + bu,
            0.0)

        # PairNorm (scale=1, graph-wide): rsqrt on EUP + multiply
        centered = upd - jnp.mean(upd, axis=0, keepdims=True)
        sq = jnp.sum(centered * centered, axis=-1, keepdims=True)   # (N, 1)
        h = centered * lax.rsqrt(EPS_PAIRNORM + jnp.mean(sq))

    # ---- readout: global_max_pool -> lin1 -> relu -> (dropout eval) -> lin2 ----
    # NOTE: an empty graph would pool to the -1e30 sentinel (segment_max -> -inf);
    # acceptable edge-case divergence for this module.
    neg = jnp.float32(-1e30)
    mask = bmask_ref[...] > 0.5                                     # (G, N, 1)
    pooled = jnp.max(jnp.where(mask, h[None, :, :], neg), axis=1)   # (G, D)

    z = jnp.maximum(
        jnp.dot(pooled, w1_ref[...], preferred_element_type=f32) + b1_ref[...],
        0.0)
    # TODO(synk): F.dropout(p=0.2) skipped -- kernel implements eval-mode (identity).
    out_ref[...] = jnp.dot(z, w2_ref[...], preferred_element_type=f32) + b2_ref[...]


# ---------------- one-time parameter packing (hoisted out of the fwd path) ----------------
def pack_params(params):
    # layer tuple layout: (Wm1, Wm2, wmd, bm, Wu1, Wu2, bu)
    Wcat = jnp.stack([jnp.concatenate([lp[0], lp[1], lp[4]], axis=1)
                      for lp in params["layers"]])                   # (L, D, 3D)
    Wu2 = jnp.stack([lp[5] for lp in params["layers"]])              # (L, D, D)
    Bpack = jnp.stack([jnp.concatenate([lp[3], lp[2], lp[6]], axis=0)
                       for lp in params["layers"]])                  # (L, 3, D)
    return dict(W_in=params["W_in"], b_in=params["b_in"],
                Wcat=Wcat, Wu2=Wu2, Bpack=Bpack,
                W1=params["W1"], b1=params["b1"],
                W2=params["W2"], b2=params["b2"])


# ---------------- wrapper: build layer-invariant operands, single launch ----------------
@functools.partial(jax.jit, static_argnames=("num_graphs",))
def mp_gi_forward(h0, pos, src, dst, batch_ids, num_graphs, packed):
    N = h0.shape[0]
    E = src.shape[0]
    D = packed["W_in"].shape[1]
    L = packed["Wcat"].shape[0]
    G = num_graphs
    f32, bf16 = jnp.float32, jnp.bfloat16

    # one-hot gather/scatter operands in bf16 (0/1 exact, half the VMEM/HBM)
    gdst = jax.nn.one_hot(dst, N, dtype=bf16)                   # (E, N) targets (h_i)
    gsrc = jax.nn.one_hot(src, N, dtype=bf16)                   # (E, N) sources (h_j)
    gdgs = jnp.concatenate([gdst, gsrc], axis=1)                # (E, 2N) fused gather
    gdstT = jax.nn.one_hot(dst, N, dtype=bf16, axis=0)          # (N, E) scatter-add
    bmask = jax.nn.one_hot(batch_ids, G, dtype=f32, axis=0)[..., None]  # (G, N, 1)
    # distances are layer-invariant: compute once in the wrapper
    dists = jnp.sqrt(jnp.sum((pos[dst] - pos[src]) ** 2,
                             axis=-1, keepdims=True)).astype(f32)        # (E, 1)

    args = (gdgs, gdstT, dists, bmask, h0,
            packed["W_in"], packed["b_in"],
            packed["Wcat"], packed["Wu2"], packed["Bpack"],
            packed["W1"], packed["b1"], packed["W2"], packed["b2"])

    flops = (2 * N * h0.shape[1] * D
             + L * (2 * N * D * 3 * D          # fused h projection
                    + 2 * E * 2 * N * D        # fused edge gather
                    + 2 * N * E * D            # scatter-add
                    + 2 * N * D * D)           # aggr @ Wu2
             + 2 * G * D * D + 2 * G * D * 2)
    bytes_accessed = sum(int(a.size) * a.dtype.itemsize for a in args) + G * 2 * 4

    # TODO(synk): knn_graph(pos, k=10) recomputation in the reference is dead code
    # (the loop always reuses data.edge_index), so it is omitted.
    # TODO(synk): at non-toy graph sizes the O(E*N) one-hots must be replaced by a
    # PrefetchScalarGridSpec edge-tiled gather/segment design (VMEM ceiling, esp. v7x).
    return pl.pallas_call(
        mp_gi_kernel,
        out_shape=jax.ShapeDtypeStruct((G, 2), jnp.float32),
        in_specs=[_vmem()] * len(args),
        out_specs=_vmem(),
        compiler_params=pltpu.CompilerParams(vmem_limit_bytes=8 * 1024 * 1024),
        cost_estimate=pl.CostEstimate(flops=flops, transcendentals=L,
                                      bytes_accessed=bytes_accessed),
    )(*args)


# ---------------- pure-JAX reference for validation ----------------
def mp_gi_reference(h0, pos, src, dst, batch_ids, num_graphs, params):
    h = jax.nn.relu(h0 @ params["W_in"] + params["b_in"])
    N = h0.shape[0]
    for (Wm1, Wm2, wmd, bm, Wu1, Wu2, bu) in params["layers"]:
        h_i = h[dst]
        h_j = h[src]
        d = jnp.sqrt(jnp.sum((pos[dst] - pos[src]) ** 2, axis=-1, keepdims=True))
        msg = jax.nn.relu(h_i @ Wm1 + h_j @ Wm2 + d @ wmd + bm)
        aggr = jax.ops.segment_sum(msg, dst, num_segments=N)
        upd = jax.nn.relu(h @ Wu1 + aggr @ Wu2 + bu)
        c = upd - jnp.mean(upd, axis=0, keepdims=True)
        h = c / jnp.sqrt(EPS_PAIRNORM + jnp.mean(jnp.sum(c * c, axis=-1)))
    pooled = jax.ops.segment_max(h, batch_ids, num_segments=num_graphs)
    z = jax.nn.relu(pooled @ params["W1"] + params["b1"])
    return z @ params["W2"] + params["b2"]


if __name__ == "__main__":
    # Sizes implied by the module: node features dim 5, emb_dim=16, num_layers=2,
    # 2 output classes; pos is 3-D, 2 graphs of 8 nodes each, kNN edges (k=4).
    N, P, D, G, K, NUM_LAYERS = 16, 3, 16, 2, 4, 2

    key = jax.random.PRNGKey(0)
    ks = jax.random.split(key, 4 + NUM_LAYERS * 7 + 4)
    it = iter(ks)

    h0 = jax.random.normal(next(it), (N, 5), dtype=jnp.float32)
    pos = jax.random.normal(next(it), (N, P), dtype=jnp.float32)
    batch_ids = jnp.concatenate([jnp.zeros(N // 2, jnp.int32), jnp.ones(N // 2, jnp.int32)])

    # Deterministic kNN edge_index (input construction, not part of the kernel).
    dmat = jnp.sum((pos[:, None, :] - pos[None, :, :]) ** 2, axis=-1)
    dmat = dmat + jnp.eye(N, dtype=jnp.float32) * 1e9
    nbrs = jnp.argsort(dmat, axis=-1)[:, :K]                # (N, K) sources per target
    dst = jnp.repeat(jnp.arange(N, dtype=jnp.int32), K)     # edge_index[1] (targets, h_i)
    src = nbrs.reshape(-1).astype(jnp.int32)                # edge_index[0] (sources, h_j)

    def p(shape):
        return 0.2 * jax.random.normal(next(it), shape, dtype=jnp.float32)

    layers = []
    W_in, b_in = p((5, D)), p((1, D))
    for _ in range(NUM_LAYERS):
        layers.append((p((D, D)), p((D, D)), p((1, D)), p((1, D)),   # mlp_msg split
                       p((D, D)), p((D, D)), p((1, D))))             # mlp_upd split
    params = {
        "W_in": W_in, "b_in": b_in,
        "layers": layers,
        "W1": p((D, D)), "b1": p((1, D)),
        "W2": p((D, 2)), "b2": p((1, 2)),
    }

    packed = pack_params(params)   # one-time packing, outside the fwd path

    out = mp_gi_forward(h0, pos, src, dst, batch_ids, G, packed)
    out = jax.block_until_ready(out)

    ref = mp_gi_reference(h0, pos, src, dst, batch_ids, G, params)
    assert out.shape == (G, 2)
    # bf16 gather/scatter operands intentionally bf16-round the projected
    # features (per perf review); validate at 1e-2.
    assert jnp.allclose(out, ref, rtol=1e-2, atol=1e-2), (out, ref)

    print("KERNEL_OK")
</pallas_src>

<mosaic_0001>
module attributes {stable_mosaic.version = 11 : i64} {
  func.func @mp_gi_kernel(%arg0: memref<64x32xbf16, #tpu.memory_space<vmem>>, %arg1: memref<16x64xbf16, #tpu.memory_space<vmem>>, %arg2: memref<64x1xf32, #tpu.memory_space<vmem>>, %arg3: memref<2x16x1xf32, #tpu.memory_space<vmem>>, %arg4: memref<16x5xf32, #tpu.memory_space<vmem>>, %arg5: memref<5x16xf32, #tpu.memory_space<vmem>>, %arg6: memref<1x16xf32, #tpu.memory_space<vmem>>, %arg7: memref<2x16x48xf32, #tpu.memory_space<vmem>>, %arg8: memref<2x16x16xf32, #tpu.memory_space<vmem>>, %arg9: memref<2x3x16xf32, #tpu.memory_space<vmem>>, %arg10: memref<16x16xf32, #tpu.memory_space<vmem>>, %arg11: memref<1x16xf32, #tpu.memory_space<vmem>>, %arg12: memref<16x2xf32, #tpu.memory_space<vmem>>, %arg13: memref<1x2xf32, #tpu.memory_space<vmem>>, %arg14: memref<2x2xf32, #tpu.memory_space<vmem>>) attributes {dimension_semantics = [], scalar_prefetch = 0 : i64, scratch_operands = 0 : i64, tpu.core_type = #tpu.core_type<tc>} {
    %c0 = arith.constant 0 : index
    %c0_0 = arith.constant 0 : index
    %0 = vector.load %arg0[%c0, %c0_0] : memref<64x32xbf16, #tpu.memory_space<vmem>>, vector<64x32xbf16>
    %c0_1 = arith.constant 0 : index
    %c0_2 = arith.constant 0 : index
    %1 = vector.load %arg1[%c0_1, %c0_2] : memref<16x64xbf16, #tpu.memory_space<vmem>>, vector<16x64xbf16>
    %c0_3 = arith.constant 0 : index
    %c0_4 = arith.constant 0 : index
    %2 = vector.load %arg2[%c0_3, %c0_4] : memref<64x1xf32, #tpu.memory_space<vmem>>, vector<64x1xf32>
    %c0_5 = arith.constant 0 : index
    %c0_6 = arith.constant 0 : index
    %3 = vector.load %arg4[%c0_5, %c0_6] : memref<16x5xf32, #tpu.memory_space<vmem>>, vector<16x5xf32>
    %c0_7 = arith.constant 0 : index
    %c0_8 = arith.constant 0 : index
    %4 = vector.load %arg5[%c0_7, %c0_8] : memref<5x16xf32, #tpu.memory_space<vmem>>, vector<5x16xf32>
    %cst = arith.constant dense<0.000000e+00> : vector<16x16xf32>
    %5 = tpu.matmul %3, %4, %cst {dimension_numbers = #tpu.dot_dimension_numbers<[1], [0], [0], [1], [0, 0, 1, 1], [], []>} : vector<16x5xf32>, vector<5x16xf32>, vector<16x16xf32> -> vector<16x16xf32>
    %c0_9 = arith.constant 0 : index
    %c0_10 = arith.constant 0 : index
    %6 = vector.load %arg6[%c0_9, %c0_10] : memref<1x16xf32, #tpu.memory_space<vmem>>, vector<1x16xf32>
    %7 = vector.broadcast %6 : vector<1x16xf32> to vector<16x16xf32>
    %8 = arith.addf %5, %7 : vector<16x16xf32>
    %cst_11 = arith.constant 0.000000e+00 : f32
    %9 = vector.broadcast %cst_11 : f32 to vector<16x16xf32>
    %10 = arith.maximumf %8, %9 : vector<16x16xf32>
    %c0_12 = arith.constant 0 : index
    %c0_13 = arith.constant 0 : index
    %c0_14 = arith.constant 0 : index
    %11 = vector.load %arg9[%c0_12, %c0_13, %c0_14] : memref<2x3x16xf32, #tpu.memory_space<vmem>>, vector<1x3x16xf32>
    %12 = vector.shape_cast %11 : vector<1x3x16xf32> to vector<3x16xf32>
    %13 = vector.extract_strided_slice %12 {offsets = [0, 0], sizes = [1, 16], strides = [1, 1]} : vector<3x16xf32> to vector<1x16xf32>
    %14 = vector.extract_strided_slice %12 {offsets = [1, 0], sizes = [1, 16], strides = [1, 1]} : vector<3x16xf32> to vector<1x16xf32>
    %15 = vector.extract_strided_slice %12 {offsets = [2, 0], sizes = [1, 16], strides = [1, 1]} : vector<3x16xf32> to vector<1x16xf32>
    %c0_15 = arith.constant 0 : index
    %c0_16 = arith.constant 0 : index
    %c0_17 = arith.constant 0 : index
    %16 = vector.load %arg7[%c0_15, %c0_16, %c0_17] : memref<2x16x48xf32, #tpu.memory_space<vmem>>, vector<1x16x48xf32>
    %17 = vector.shape_cast %16 : vector<1x16x48xf32> to vector<16x48xf32>
    %cst_18 = arith.constant dense<0.000000e+00> : vector<16x48xf32>
    %18 = tpu.matmul %10, %17, %cst_18 {dimension_numbers = #tpu.dot_dimension_numbers<[1], [0], [0], [1], [0, 0, 1, 1], [], []>} : vector<16x16xf32>, vector<16x48xf32>, vector<16x48xf32> -> vector<16x48xf32>
    %19 = vector.extract_strided_slice %18 {offsets = [0, 0], sizes = [16, 16], strides = [1, 1]} : vector<16x48xf32> to vector<16x16xf32>
    %20 = vector.broadcast %13 : vector<1x16xf32> to vector<16x16xf32>
    %21 = arith.addf %19, %20 : vector<16x16xf32>
    %22 = vector.extract_strided_slice %18 {offsets = [0, 16], sizes = [16, 16], strides = [1, 1]} : vector<16x48xf32> to vector<16x16xf32>
    %23 = vector.extract_strided_slice %18 {offsets = [0, 32], sizes = [16, 16], strides = [1, 1]} : vector<16x48xf32> to vector<16x16xf32>
    %24 = tpu.concatenate %21, %22 in 0 : vector<16x16xf32>, vector<16x16xf32> -> vector<32x16xf32>
    %25 = arith.truncf %24 : vector<32x16xf32> to vector<32x16xbf16>
    %cst_19 = arith.constant dense<0.000000e+00> : vector<64x16xf32>
    %26 = tpu.matmul %0, %25, %cst_19 {dimension_numbers = #tpu.dot_dimension_numbers<[1], [0], [0], [1], [0, 0, 1, 1], [], []>} : vector<64x32xbf16>, vector<32x16xbf16>, vector<64x16xf32> -> vector<64x16xf32>
    %27 = vector.broadcast %2 : vector<64x1xf32> to vector<64x16xf32>
    %28 = vector.broadcast %14 : vector<1x16xf32> to vector<64x16xf32>
    %29 = arith.mulf %27, %28 : vector<64x16xf32>
    %30 = arith.addf %26, %29 : vector<64x16xf32>
    %cst_20 = arith.constant 0.000000e+00 : f32
    %31 = vector.broadcast %cst_20 : f32 to vector<64x16xf32>
    %32 = arith.maximumf %30, %31 : vector<64x16xf32>
    %33 = arith.truncf %32 : vector<64x16xf32> to vector<64x16xbf16>
    %cst_21 = arith.constant dense<0.000000e+00> : vector<16x16xf32>
    %34 = tpu.matmul %1, %33, %cst_21 {dimension_numbers = #tpu.dot_dimension_numbers<[1], [0], [0], [1], [0, 0, 1, 1], [], []>} : vector<16x64xbf16>, vector<64x16xbf16>, vector<16x16xf32> -> vector<16x16xf32>
    %c0_22 = arith.constant 0 : index
    %c0_23 = arith.constant 0 : index
    %c0_24 = arith.constant 0 : index
    %35 = vector.load %arg8[%c0_22, %c0_23, %c0_24] : memref<2x16x16xf32, #tpu.memory_space<vmem>>, vector<1x16x16xf32>
    %36 = vector.shape_cast %35 : vector<1x16x16xf32> to vector<16x16xf32>
    %cst_25 = arith.constant dense<0.000000e+00> : vector<16x16xf32>
    %37 = tpu.matmul %34, %36, %cst_25 {dimension_numbers = #tpu.dot_dimension_numbers<[1], [0], [0], [1], [0, 0, 1, 1], [], []>} : vector<16x16xf32>, vector<16x16xf32>, vector<16x16xf32> -> vector<16x16xf32>
    %38 = arith.addf %23, %37 : vector<16x16xf32>
    %39 = vector.broadcast %15 : vector<1x16xf32> to vector<16x16xf32>
    %40 = arith.addf %38, %39 : vector<16x16xf32>
    %cst_26 = arith.constant 0.000000e+00 : f32
    %41 = vector.broadcast %cst_26 : f32 to vector<16x16xf32>
    %42 = arith.maximumf %40, %41 : vector<16x16xf32>
    %cst_27 = arith.constant dense<0.000000e+00> : vector<16xf32>
    %43 = vector.multi_reduction <add>, %42, %cst_27 [0] : vector<16x16xf32> to vector<16xf32>
    %44 = vector.shape_cast %43 : vector<16xf32> to vector<1x16xf32>
    %cst_28 = arith.constant 1.600000e+01 : f32
    %45 = vector.broadcast %cst_28 : f32 to vector<1x16xf32>
    %46 = arith.divf %44, %45 : vector<1x16xf32>
    %47 = vector.broadcast %46 : vector<1x16xf32> to vector<16x16xf32>
    %48 = arith.subf %42, %47 : vector<16x16xf32>
    %49 = arith.mulf %48, %48 : vector<16x16xf32>
    %cst_29 = arith.constant dense<0.000000e+00> : vector<16xf32>
    %50 = vector.multi_reduction <add>, %49, %cst_29 [1] : vector<16x16xf32> to vector<16xf32>
    %51 = vector.shape_cast %50 : vector<16xf32> to vector<16x1xf32>
    %52 = vector.shape_cast %51 : vector<16x1xf32> to vector<1x16x1xf32>
    %cst_30 = arith.constant dense<0.000000e+00> : vector<1xf32>
    %53 = vector.multi_reduction <add>, %52, %cst_30 [1, 2] : vector<1x16x1xf32> to vector<1xf32>
    %54 = vector.shape_cast %53 : vector<1xf32> to vector<1x1x1xf32>
    %55 = vector.extract %54[0, 0, 0] : f32 from vector<1x1x1xf32>
    %cst_31 = arith.constant 1.600000e+01 : f32
    %56 = arith.divf %55, %cst_31 : f32
    %cst_32 = arith.constant 9.99999974E-6 : f32
    %57 = arith.addf %cst_32, %56 : f32
    %58 = math.rsqrt %57 : f32
    %59 = vector.broadcast %58 : f32 to vector<16x16xf32>
    %60 = arith.mulf %48, %59 : vector<16x16xf32>
    %c1 = arith.constant 1 : index
    %c0_33 = arith.constant 0 : index
    %c0_34 = arith.constant 0 : index
    %61 = vector.load %arg9[%c1, %c0_33, %c0_34] : memref<2x3x16xf32, #tpu.memory_space<vmem>>, vector<1x3x16xf32>
    %62 = vector.shape_cast %61 : vector<1x3x16xf32> to vector<3x16xf32>
    %63 = vector.extract_strided_slice %62 {offsets = [0, 0], sizes = [1, 16], strides = [1, 1]} : vector<3x16xf32> to vector<1x16xf32>
    %64 = vector.extract_strided_slice %62 {offsets = [1, 0], sizes = [1, 16], strides = [1, 1]} : vector<3x16xf32> to vector<1x16xf32>
    %65 = vector.extract_strided_slice %62 {offsets = [2, 0], sizes = [1, 16], strides = [1, 1]} : vector<3x16xf32> to vector<1x16xf32>
    %c1_35 = arith.constant 1 : index
    %c0_36 = arith.constant 0 : index
    %c0_37 = arith.constant 0 : index
    %66 = vector.load %arg7[%c1_35, %c0_36, %c0_37] : memref<2x16x48xf32, #tpu.memory_space<vmem>>, vector<1x16x48xf32>
    %67 = vector.shape_cast %66 : vector<1x16x48xf32> to vector<16x48xf32>
    %cst_38 = arith.constant dense<0.000000e+00> : vector<16x48xf32>
    %68 = tpu.matmul %60, %67, %cst_38 {dimension_numbers = #tpu.dot_dimension_numbers<[1], [0], [0], [1], [0, 0, 1, 1], [], []>} : vector<16x16xf32>, vector<16x48xf32>, vector<16x48xf32> -> vector<16x48xf32>
    %69 = vector.extract_strided_slice %68 {offsets = [0, 0], sizes = [16, 16], strides = [1, 1]} : vector<16x48xf32> to vector<16x16xf32>
    %70 = vector.broadcast %63 : vector<1x16xf32> to vector<16x16xf32>
    %71 = arith.addf %69, %70 : vector<16x16xf32>
    %72 = vector.extract_strided_slice %68 {offsets = [0, 16], sizes = [16, 16], strides = [1, 1]} : vector<16x48xf32> to vector<16x16xf32>
    %73 = vector.extract_strided_slice %68 {offsets = [0, 32], sizes = [16, 16], strides = [1, 1]} : vector<16x48xf32> to vector<16x16xf32>
    %74 = tpu.concatenate %71, %72 in 0 : vector<16x16xf32>, vector<16x16xf32> -> vector<32x16xf32>
    %75 = arith.truncf %74 : vector<32x16xf32> to vector<32x16xbf16>
    %cst_39 = arith.constant dense<0.000000e+00> : vector<64x16xf32>
    %76 = tpu.matmul %0, %75, %cst_39 {dimension_numbers = #tpu.dot_dimension_numbers<[1], [0], [0], [1], [0, 0, 1, 1], [], []>} : vector<64x32xbf16>, vector<32x16xbf16>, vector<64x16xf32> -> vector<64x16xf32>
    %77 = vector.broadcast %2 : vector<64x1xf32> to vector<64x16xf32>
    %78 = vector.broadcast %64 : vector<1x16xf32> to vector<64x16xf32>
    %79 = arith.mulf %77, %78 : vector<64x16xf32>
    %80 = arith.addf %76, %79 : vector<64x16xf32>
    %cst_40 = arith.constant 0.000000e+00 : f32
    %81 = vector.broadcast %cst_40 : f32 to vector<64x16xf32>
    %82 = arith.maximumf %80, %81 : vector<64x16xf32>
    %83 = arith.truncf %82 : vector<64x16xf32> to vector<64x16xbf16>
    %cst_41 = arith.constant dense<0.000000e+00> : vector<16x16xf32>
    %84 = tpu.matmul %1, %83, %cst_41 {dimension_numbers = #tpu.dot_dimension_numbers<[1], [0], [0], [1], [0, 0, 1, 1], [], []>} : vector<16x64xbf16>, vector<64x16xbf16>, vector<16x16xf32> -> vector<16x16xf32>
    %c1_42 = arith.constant 1 : index
    %c0_43 = arith.constant 0 : index
    %c0_44 = arith.constant 0 : index
    %85 = vector.load %arg8[%c1_42, %c0_43, %c0_44] : memref<2x16x16xf32, #tpu.memory_space<vmem>>, vector<1x16x16xf32>
    %86 = vector.shape_cast %85 : vector<1x16x16xf32> to vector<16x16xf32>
    %cst_45 = arith.constant dense<0.000000e+00> : vector<16x16xf32>
    %87 = tpu.matmul %84, %86, %cst_45 {dimension_numbers = #tpu.dot_dimension_numbers<[1], [0], [0], [1], [0, 0, 1, 1], [], []>} : vector<16x16xf32>, vector<16x16xf32>, vector<16x16xf32> -> vector<16x16xf32>
    %88 = arith.addf %73, %87 : vector<16x16xf32>
    %89 = vector.broadcast %65 : vector<1x16xf32> to vector<16x16xf32>
    %90 = arith.addf %88, %89 : vector<16x16xf32>
    %cst_46 = arith.constant 0.000000e+00 : f32
    %91 = vector.broadcast %cst_46 : f32 to vector<16x16xf32>
    %92 = arith.maximumf %90, %91 : vector<16x16xf32>
    %cst_47 = arith.constant dense<0.000000e+00> : vector<16xf32>
    %93 = vector.multi_reduction <add>, %92, %cst_47 [0] : vector<16x16xf32> to vector<16xf32>
    %94 = vector.shape_cast %93 : vector<16xf32> to vector<1x16xf32>
    %cst_48 = arith.constant 1.600000e+01 : f32
    %95 = vector.broadcast %cst_48 : f32 to vector<1x16xf32>
    %96 = arith.divf %94, %95 : vector<1x16xf32>
    %97 = vector.broadcast %96 : vector<1x16xf32> to vector<16x16xf32>
    %98 = arith.subf %92, %97 : vector<16x16xf32>
    %99 = arith.mulf %98, %98 : vector<16x16xf32>
    %cst_49 = arith.constant dense<0.000000e+00> : vector<16xf32>
    %100 = vector.multi_reduction <add>, %99, %cst_49 [1] : vector<16x16xf32> to vector<16xf32>
    %101 = vector.shape_cast %100 : vector<16xf32> to vector<16x1xf32>
    %102 = vector.shape_cast %101 : vector<16x1xf32> to vector<1x16x1xf32>
    %cst_50 = arith.constant dense<0.000000e+00> : vector<1xf32>
    %103 = vector.multi_reduction <add>, %102, %cst_50 [1, 2] : vector<1x16x1xf32> to vector<1xf32>
    %104 = vector.shape_cast %103 : vector<1xf32> to vector<1x1x1xf32>
    %105 = vector.extract %104[0, 0, 0] : f32 from vector<1x1x1xf32>
    %cst_51 = arith.constant 1.600000e+01 : f32
    %106 = arith.divf %105, %cst_51 : f32
    %cst_52 = arith.constant 9.99999974E-6 : f32
    %107 = arith.addf %cst_52, %106 : f32
    %108 = math.rsqrt %107 : f32
    %109 = vector.broadcast %108 : f32 to vector<16x16xf32>
    %110 = arith.mulf %98, %109 : vector<16x16xf32>
    %c0_53 = arith.constant 0 : index
    %c0_54 = arith.constant 0 : index
    %c0_55 = arith.constant 0 : index
    %111 = vector.load %arg3[%c0_53, %c0_54, %c0_55] : memref<2x16x1xf32, #tpu.memory_space<vmem>>, vector<2x16x1xf32>
    %cst_56 = arith.constant 5.000000e-01 : f32
    %112 = vector.broadcast %cst_56 : f32 to vector<2x16x1xf32>
    %113 = arith.cmpf ogt, %111, %112 : vector<2x16x1xf32>
    %114 = vector.shape_cast %110 : vector<16x16xf32> to vector<1x16x16xf32>
    %cst_57 = arith.constant -1.000000e+30 : f32
    %115 = vector.shape_cast %113 : vector<2x16x1xi1> to vector<2x16x1xi1>
    %116 = vector.broadcast %115 : vector<2x16x1xi1> to vector<2x16x16xi1>
    %117 = vector.shape_cast %114 : vector<1x16x16xf32> to vector<1x16x16xf32>
    %118 = vector.broadcast %117 : vector<1x16x16xf32> to vector<2x16x16xf32>
    %119 = vector.broadcast %cst_57 : f32 to vector<2x16x16xf32>
    %120 = arith.select %116, %118, %119 : vector<2x16x16xi1>, vector<2x16x16xf32>
    %cst_58 = arith.constant dense<0xFF800000> : vector<2x16xf32>
    %121 = vector.multi_reduction <maximumf>, %120, %cst_58 [1] : vector<2x16x16xf32> to vector<2x16xf32>
    %c0_59 = arith.constant 0 : index
    %c0_60 = arith.constant 0 : index
    %122 = vector.load %arg10[%c0_59, %c0_60] : memref<16x16xf32, #tpu.memory_space<vmem>>, vector<16x16xf32>
    %cst_61 = arith.constant dense<0.000000e+00> : vector<2x16xf32>
    %123 = tpu.matmul %121, %122, %cst_61 {dimension_numbers = #tpu.dot_dimension_numbers<[1], [0], [0], [1], [0, 0, 1, 1], [], []>} : vector<2x16xf32>, vector<16x16xf32>, vector<2x16xf32> -> vector<2x16xf32>
    %c0_62 = arith.constant 0 : index
    %c0_63 = arith.constant 0 : index
    %124 = vector.load %arg11[%c0_62, %c0_63] : memref<1x16xf32, #tpu.memory_space<vmem>>, vector<1x16xf32>
    %125 = vector.broadcast %124 : vector<1x16xf32> to vector<2x16xf32>
    %126 = arith.addf %123, %125 : vector<2x16xf32>
    %cst_64 = arith.constant 0.000000e+00 : f32
    %127 = vector.broadcast %cst_64 : f32 to vector<2x16xf32>
    %128 = arith.maximumf %126, %127 : vector<2x16xf32>
    %c0_65 = arith.constant 0 : index
    %c0_66 = arith.constant 0 : index
    %129 = vector.load %arg12[%c0_65, %c0_66] : memref<16x2xf32, #tpu.memory_space<vmem>>, vector<16x2xf32>
    %cst_67 = arith.constant dense<0.000000e+00> : vector<2x2xf32>
    %130 = tpu.matmul %128, %129, %cst_67 {dimension_numbers = #tpu.dot_dimension_numbers<[1], [0], [0], [1], [0, 0, 1, 1], [], []>} : vector<2x16xf32>, vector<16x2xf32>, vector<2x2xf32> -> vector<2x2xf32>
    %c0_68 = arith.constant 0 : index
    %c0_69 = arith.constant 0 : index
    %131 = vector.load %arg13[%c0_68, %c0_69] : memref<1x2xf32, #tpu.memory_space<vmem>>, vector<1x2xf32>
    %132 = vector.broadcast %131 : vector<1x2xf32> to vector<2x2xf32>
    %133 = arith.addf %130, %132 : vector<2x2xf32>
    %c0_70 = arith.constant 0 : index
    %c0_71 = arith.constant 0 : index
    %134 = vector.load %arg14[%c0_70, %c0_71] : memref<2x2xf32, #tpu.memory_space<vmem>>, vector<2x2xf32>
    tpu.vector_store %arg14[%c0_70, %c0_71], %133 {strides = array<i32>} : memref<2x2xf32, #tpu.memory_space<vmem>>, vector<2x2xf32>,
    return
  }
}

</mosaic_0001>

<llo_original>
// kernel: mp_gi_forward.1
$region0: #{mp_gi_forward.1}
  #allocation0 [shape = 'u32[]', space=smem, size = 0x4, offset = 0x4, fixed_abs, tag = 'smem constant byte address 0x4 - core index']
  #allocation1 [shape = 'u32[72,128]{1,0:T(1,128)}', space=vmem, size = 0x9000, scoped, tag = 'internal scratch']
  %s0 = inlined_call_operand.vmem [shape: bf16[64,32], index: 0, kind: input, shape index: {}]
  %s1 = inlined_call_operand.vmem [shape: bf16[16,64], index: 1, kind: input, shape index: {}]
  %s2 = inlined_call_operand.vmem [shape: f32[64,1], index: 2, kind: input, shape index: {}]
  %s3 = inlined_call_operand.vmem [shape: f32[2,16,1], index: 3, kind: input, shape index: {}]
  %s4 = inlined_call_operand.vmem [shape: f32[16,5], index: 4, kind: input, shape index: {}]
  %s5 = inlined_call_operand.vmem [shape: f32[5,16], index: 5, kind: input, shape index: {}]
  %s6 = inlined_call_operand.vmem [shape: f32[1,16], index: 6, kind: input, shape index: {}]
  %s7 = inlined_call_operand.vmem [shape: f32[2,16,48], index: 7, kind: input, shape index: {}]
  %s8 = inlined_call_operand.vmem [shape: f32[2,16,16], index: 8, kind: input, shape index: {}]
  %s9 = inlined_call_operand.vmem [shape: f32[2,3,16], index: 9, kind: input, shape index: {}]
  %s10 = inlined_call_operand.vmem [shape: f32[16,16], index: 10, kind: input, shape index: {}]
  %s11 = inlined_call_operand.vmem [shape: f32[1,16], index: 11, kind: input, shape index: {}]
  %s12 = inlined_call_operand.vmem [shape: f32[16,2], index: 12, kind: input, shape index: {}]
  %s13 = inlined_call_operand.vmem [shape: f32[1,2], index: 13, kind: input, shape index: {}]
  %s14 = inlined_call_operand.hbm [shape: f32[2,2], index: 14, kind: output, shape index: {}]
  %s15 = sld [smem:[#allocation0]]
  $region66: #{mp_gi_forward.1} parent=0
    _
  %s17 = ssub.s32 1, %s15
  %s18 = scalar_select 0, %s17, %s15
  $region1: #{mp_gi_forward.1} parent=0
    #allocation2 [shape = 'u8[1024]{0}', space=vmem, size = 0x400, scoped, tag = 'output window, operand 0, single buffered']
    #allocation3 [shape = 's32[1]{0}', space=sflag, size = 0x4, scoped, tag = 'scoped memory for mp_gi_forward.1']
    %19 = vsyncpa [#allocation3], 0
    // Predicated region
    $region2: #{mp_gi_forward.1} parent=1 // pred_check
      _
    $region3: #{mp_gi_forward.1} parent=1 // pred_check_branch
      %21 = sbr.rel (0) target = $region5
    $region4: #{mp_gi_forward.1} parent=1 // pred_region
      _
    $region5: #{mp_gi_forward.1} parent=1 // pred_fallthru
      _
    // Predicated region
    $region6: #{mp_gi_forward.1} parent=1 // pred_check
      _
    $region7: #{mp_gi_forward.1} parent=1 // pred_check_branch
      %23 = sbr.rel (0) target = $region9
    $region8: #{mp_gi_forward.1} parent=1 // pred_region
      _
    $region9: #{mp_gi_forward.1} parent=1 // pred_fallthru
      _
    // Predicated region
    $region10: #{mp_gi_forward.1} parent=1 // pred_check
      _
    $region11: #{mp_gi_forward.1} parent=1 // pred_check_branch
      %25 = sbr.rel (0) target = $region13
    $region12: #{mp_gi_forward.1} parent=1 // pred_region
      _
    $region13: #{mp_gi_forward.1} parent=1 // pred_fallthru
      _
    // Predicated region
    $region14: #{mp_gi_forward.1} parent=1 // pred_check
      _
    $region15: #{mp_gi_forward.1} parent=1 // pred_check_branch
      %27 = sbr.rel (0) target = $region17
    $region16: #{mp_gi_forward.1} parent=1 // pred_region
      _
    $region17: #{mp_gi_forward.1} parent=1 // pred_fallthru
      _
    // Predicated region
    $region18: #{mp_gi_forward.1} parent=1 // pred_check
      _
    $region19: #{mp_gi_forward.1} parent=1 // pred_check_branch
      %29 = sbr.rel (0) target = $region21
    $region20: #{mp_gi_forward.1} parent=1 // pred_region
      _
    $region21: #{mp_gi_forward.1} parent=1 // pred_fallthru
      _
    // Predicated region
    $region22: #{mp_gi_forward.1} parent=1 // pred_check
      _
    $region23: #{mp_gi_forward.1} parent=1 // pred_check_branch
      %31 = sbr.rel (0) target = $region25
    $region24: #{mp_gi_forward.1} parent=1 // pred_region
      _
    $region25: #{mp_gi_forward.1} parent=1 // pred_fallthru
      _
    // Predicated region
    $region26: #{mp_gi_forward.1} parent=1 // pred_check
      _
    $region27: #{mp_gi_forward.1} parent=1 // pred_check_branch
      %33 = sbr.rel (0) target = $region29
    $region28: #{mp_gi_forward.1} parent=1 // pred_region
      _
    $region29: #{mp_gi_forward.1} parent=1 // pred_fallthru
      _
    // Predicated region
    $region30: #{mp_gi_forward.1} parent=1 // pred_check
      _
    $region31: #{mp_gi_forward.1} parent=1 // pred_check_branch
      %35 = sbr.rel (0) target = $region33
    $region32: #{mp_gi_forward.1} parent=1 // pred_region
      _
    $region33: #{mp_gi_forward.1} parent=1 // pred_fallthru
      _
    // Predicated region
    $region34: #{mp_gi_forward.1} parent=1 // pred_check
      _
    $region35: #{mp_gi_forward.1} parent=1 // pred_check_branch
      %37 = sbr.rel (0) target = $region37
    $region36: #{mp_gi_forward.1} parent=1 // pred_region
      _
    $region37: #{mp_gi_forward.1} parent=1 // pred_fallthru
      _
    // Predicated region
    $region38: #{mp_gi_forward.1} parent=1 // pred_check
      _
    $region39: #{mp_gi_forward.1} parent=1 // pred_check_branch
      %39 = sbr.rel (0) target = $region41
    $region40: #{mp_gi_forward.1} parent=1 // pred_region
      _
    $region41: #{mp_gi_forward.1} parent=1 // pred_fallthru
      _
    // Predicated region
    $region42: #{mp_gi_forward.1} parent=1 // pred_check
      _
    $region43: #{mp_gi_forward.1} parent=1 // pred_check_branch
      %41 = sbr.rel (0) target = $region45
    $region44: #{mp_gi_forward.1} parent=1 // pred_region
      _
    $region45: #{mp_gi_forward.1} parent=1 // pred_fallthru
      _
    // Predicated region
    $region46: #{mp_gi_forward.1} parent=1 // pred_check
      _
    $region47: #{mp_gi_forward.1} parent=1 // pred_check_branch
      %43 = sbr.rel (0) target = $region49
    $region48: #{mp_gi_forward.1} parent=1 // pred_region
      _
    $region49: #{mp_gi_forward.1} parent=1 // pred_fallthru
      _
    // Predicated region
    $region50: #{mp_gi_forward.1} parent=1 // pred_check
      _
    $region51: #{mp_gi_forward.1} parent=1 // pred_check_branch
      %45 = sbr.rel (0) target = $region53
    $region52: #{mp_gi_forward.1} parent=1 // pred_region
      _
    $region53: #{mp_gi_forward.1} parent=1 // pred_fallthru
      _
    // Predicated region
    $region54: #{mp_gi_forward.1} parent=1 // pred_check
      _
    $region55: #{mp_gi_forward.1} parent=1 // pred_check_branch
      %47 = sbr.rel (0) target = $region57
    $region56: #{mp_gi_forward.1} parent=1 // pred_region
      _
    $region57: #{mp_gi_forward.1} parent=1 // pred_fallthru
      _
    %v49 = vld [vmem:[%s0] sm:$0xf]
    %v50 = vld [vmem:[%s0 + $0x4] sm:$0xf]
    %v51 = vld [vmem:[%s0 + $0x8] sm:$0xf]
    %v52 = vld [vmem:[%s0 + $0xc] sm:$0xf]
    %v53 = vld [vmem:[%s0 + $0x10] sm:$0xf]
    %v54 = vld [vmem:[%s0 + $0x14] sm:$0xf]
    %v55 = vld [vmem:[%s0 + $0x18] sm:$0xf]
    %v56 = vld [vmem:[%s0 + $0x1c] sm:$0xf]
    %v57 = vld [vmem:[%s1] sm:$0xf]
    %v58 = vld [vmem:[%s1 + $0x4] sm:$0xf]
    %v59 = vld [vmem:[%s2] sm:$0xff]
    %v60 = vld [vmem:[%s2 + $0x8] sm:$0xff]
    %v61 = vld [vmem:[%s2 + $0x10] sm:$0xff]
    %v62 = vld [vmem:[%s2 + $0x18] sm:$0xff]
    %v63 = vld [vmem:[%s2 + $0x20] sm:$0xff]
    %v64 = vld [vmem:[%s2 + $0x28] sm:$0xff]
    %v65 = vld [vmem:[%s2 + $0x30] sm:$0xff]
    %v66 = vld [vmem:[%s2 + $0x38] sm:$0xff]
    %v67 = vld [vmem:[%s4] sm:$0xff]
    %v68 = vld [vmem:[%s4 + $0x8] sm:$0xff]
    %v69 = vld [vmem:[%s5] sm:$0x1f]
    %v70 = vld [vmem:[%s6] sm:$0x1]
    %v72 = vperm.slane %v70, 0
    %vm74 = vcmask 39936
    %v76 = vsel %vm74, %v67, 0
    %v79 = vsel %vm74, %v68, 0
    %vm81 = vcmask 1044480
    %v83 = vsel %vm81, %v69, 0
    %85 = vmatpush.msra.mxu0 0.0
    %86 = vmatpush.msra.mxu0 0.0
    %87 = vmatpush.msra.mxu0 0.0
    %88 = vmatpush.msra.mxu0 0.0
    %89 = vmatpush.msra.mxu0 0.0
    %90 = vmatpush.msra.mxu0 0.0
    %91 = vmatpush.msra.mxu0 0.0
    %92 = vmatpush.msra.mxu0 0.0
    %93 = vmatpush.msra.mxu0 0.0
    %94 = vmatpush.msra.mxu0 0.0
    %95 = vmatpush.msra.mxu0 0.0
    %96 = vmatpush.msra.mxu0 0.0
    %97 = vmatpush.msra.mxu0 0.0
    %98 = vmatpush.msra.mxu0 0.0
    %99 = vmatpush.msra.mxu0 0.0
    %100 = vmatpush.msra.mxu0 %v83
    %101 = vmatmul.f32.gmra.mxu0 %v76
    %v102 = vpop.f32.mrf.mxu0
    %v103 = vadd.f32 %v72, %v102
    %104 = vmatmul.f32.gmra.mxu0 %v79
    %v105 = vpop.f32.mrf.mxu0
    %v106 = vadd.f32 %v72, %v105
    %107 = vdwg.mxu0
    %v108 = vmax.f32 %v103, 0.0
    %v109 = vmax.f32 %v106, 0.0
    %v110 = vld [vmem:[%s9] sm:$0x7]
    %v111 = vld [vmem:[%s7] sm:$0xff]
    %v112 = vld [vmem:[%s7 + $0x8] sm:$0xff]
    %vm113 = vcmask 130048
    %v115 = vsel %vm113, %v108, 0
    %v118 = vsel %vm113, %v109, 0
    %120 = vmatpush.msra.mxu0 0.0
    %121 = vmatpush.msra.mxu0 0.0
    %122 = vmatpush.msra.mxu0 0.0
    %123 = vmatpush.msra.mxu0 0.0
    %124 = vmatpush.msra.mxu0 0.0
    %125 = vmatpush.msra.mxu0 0.0
    %126 = vmatpush.msra.mxu0 0.0
    %127 = vmatpush.msra.mxu0 0.0
    %128 = vmatpush.msra.mxu0 0.0
    %129 = vmatpush.msra.mxu0 0.0
    %130 = vmatpush.msra.mxu0 0.0
    %131 = vmatpush.msra.mxu0 0.0
    %132 = vmatpush.msra.mxu0 0.0
    %133 = vmatpush.msra.mxu0 0.0
    %134 = vmatpush.msra.mxu0 %v112
    %135 = vmatpush.msra.mxu0 %v111
    %136 = vmatmul.f32.gmra.mxu0 %v115
    %v137 = vpop.f32.mrf.mxu0
    %v138 = vadd.f32 0.0, %v137
    %139 = vmatmul.f32.gmra.mxu0 %v118
    %v140 = vpop.f32.mrf.mxu0
    %v141 = vadd.f32 0.0, %v140
    %142 = vdwg.mxu0
    %v143 = vperm.slane %v110, 0
    %v144 = vadd.f32 %v138, %v143
    %v145 = vadd.f32 %v141, %v143
    %148 = vrot.lane.b32.xlu0 %v138, 112
    %v149 = vpop.permute.xlu0 %148
    %150 = vrot.lane.b32.xlu0 %v141, 112
    %v151 = vpop.permute.xlu0 %150
    %v154 = vpack.c.bf16 %v145, %v144
    %v155 = vpack.c.bf16 %v151, %v149
    %157 = vset.pattern.permute.xlu0 0
    %158 = vperm.xlu0 %157, %v59
    %v159 = vpop.permute.xlu0 %158
    %162 = vset.pattern.permute.xlu0 0
    %163 = vperm.xlu0 %162, %v60
    %v164 = vpop.permute.xlu0 %163
    %167 = vset.pattern.permute.xlu0 0
    %168 = vperm.xlu0 %167, %v61
    %v169 = vpop.permute.xlu0 %168
    %172 = vset.pattern.permute.xlu0 0
    %173 = vperm.xlu0 %172, %v62
    %v174 = vpop.permute.xlu0 %173
    %177 = vset.pattern.permute.xlu0 0
    %178 = vperm.xlu0 %177, %v63
    %v179 = vpop.permute.xlu0 %178
    %182 = vset.pattern.permute.xlu0 0
    %183 = vperm.xlu0 %182, %v64
    %v184 = vpop.permute.xlu0 %183
    %187 = vset.pattern.permute.xlu0 0
    %188 = vperm.xlu0 %187, %v65
    %v189 = vpop.permute.xlu0 %188
    %192 = vset.pattern.permute.xlu0 0
    %193 = vperm.xlu0 %192, %v66
    %v194 = vpop.permute.xlu0 %193
    %v196 = vperm.slane %v110, 1
    %v197 = vmul.f32 %v159, %v196
    %v198 = vmul.f32 %v164, %v196
    %v199 = vmul.f32 %v169, %v196
    %v200 = vmul.f32 %v174, %v196
    %v201 = vmul.f32 %v179, %v196
    %v202 = vmul.f32 %v184, %v196
    %v203 = vmul.f32 %v189, %v196
    %v204 = vmul.f32 %v194, %v196
    %v213 = vunpack.c.l.b16 %v49
    %v214 = vunpack.c.l.b16 %v50
    %v215 = vunpack.c.l.b16 %v51
    %v216 = vunpack.c.l.b16 %v52
    %v217 = vunpack.c.l.b16 %v53
    %v218 = vunpack.c.l.b16 %v54
    %v219 = vunpack.c.l.b16 %v55
    %v220 = vunpack.c.l.b16 %v56
    %v221 = vpack.c.b16 %v214, %v213
    %v222 = vpack.c.b16 %v216, %v215
    %v223 = vpack.c.b16 %v218, %v217
    %v224 = vpack.c.b16 %v220, %v219
    %vm225 = vcmask 261120
    %v227 = vsel %vm225, %v221, 0
    %v230 = vsel %vm225, %v222, 0
    %v233 = vsel %vm225, %v223, 0
    %v236 = vsel %vm225, %v224, 0
    %238 = vmatpush.bf16.msra.mxu0 0
    %239 = vmatpush.bf16.msra.mxu0 0
    %240 = vmatpush.bf16.msra.mxu0 0
    %241 = vmatpush.bf16.msra.mxu0 0
    %242 = vmatpush.bf16.msra.mxu0 0
    %243 = vmatpush.bf16.msra.mxu0 0
    %244 = vmatpush.bf16.msra.mxu0 %v155
    %245 = vmatpush.bf16.msra.mxu0 %v154
    %246 = vmatmul.bf16.gmra.mxu0 %v227
    %v247 = vpop.f32.mrf.mxu0
    %v248 = vadd.f32 %v197, %v247
    %v249 = vpop.f32.mrf.mxu0
    %v250 = vadd.f32 %v198, %v249
    %251 = vmatmul.bf16.gmra.mxu0 %v230
    %v252 = vpop.f32.mrf.mxu0
    %v253 = vadd.f32 %v199, %v252
    %v254 = vpop.f32.mrf.mxu0
    %v255 = vadd.f32 %v200, %v254
    %256 = vmatmul.bf16.gmra.mxu0 %v233
    %v257 = vpop.f32.mrf.mxu0
    %v258 = vadd.f32 %v201, %v257
    %v259 = vpop.f32.mrf.mxu0
    %v260 = vadd.f32 %v202, %v259
    %261 = vmatmul.bf16.gmra.mxu0 %v236
    %v262 = vpop.f32.mrf.mxu0
    %v263 = vadd.f32 %v203, %v262
    %v264 = vpop.f32.mrf.mxu0
    %v265 = vadd.f32 %v204, %v264
    %266 = vdwg.mxu0
    %v267 = vmax.f32 %v248, 0.0
    %v268 = vmax.f32 %v250, 0.0
    %v269 = vmax.f32 %v253, 0.0
    %v270 = vmax.f32 %v255, 0.0
    %v271 = vmax.f32 %v258, 0.0
    %v272 = vmax.f32 %v260, 0.0
    %v273 = vmax.f32 %v263, 0.0
    %v274 = vmax.f32 %v265, 0.0
    %v275 = vpack.c.bf16 %v268, %v267
    %v276 = vpack.c.bf16 %v270, %v269
    %v277 = vpack.c.bf16 %v272, %v271
    %v278 = vpack.c.bf16 %v274, %v273
    %v281 = vunpack.c.l.b16 %v57
    %v282 = vunpack.c.l.b16 %v58
    %v283 = vpack.c.b16 %v282, %v281
    %vm284 = vcmask 523264
    %v286 = vsel %vm284, %v283, 0
    %288 = vmatpush.bf16.msra.mxu0 0
    %289 = vmatpush.bf16.msra.mxu0 0
    %290 = vmatpush.bf16.msra.mxu0 0
    %291 = vmatpush.bf16.msra.mxu0 0
    %292 = vmatpush.bf16.msra.mxu0 %v278
    %293 = vmatpush.bf16.msra.mxu0 %v277
    %294 = vmatpush.bf16.msra.mxu0 %v276
    %295 = vmatpush.bf16.msra.mxu0 %v275
    %296 = vmatmul.bf16.gmra.mxu0 %v286
    %v297 = vpop.f32.mrf.mxu0
    %v298 = vadd.f32 0.0, %v297
    %v299 = vpop.f32.mrf.mxu0
    %v300 = vadd.f32 0.0, %v299
    %301 = vdwg.mxu0
    %v302 = vld [vmem:[%s8] sm:$0xff]
    %v303 = vld [vmem:[%s8 + $0x8] sm:$0xff]
    %v305 = vsel %vm113, %v298, 0
    %v308 = vsel %vm113, %v300, 0
    %310 = vmatpush.msra.mxu0 0.0
    %311 = vmatpush.msra.mxu0 0.0
    %312 = vmatpush.msra.mxu0 0.0
    %313 = vmatpush.msra.mxu0 0.0
    %314 = vmatpush.msra.mxu0 0.0
    %315 = vmatpush.msra.mxu0 0.0
    %316 = vmatpush.msra.mxu0 0.0
    %317 = vmatpush.msra.mxu0 0.0
    %318 = vmatpush.msra.mxu0 0.0
    %319 = vmatpush.msra.mxu0 0.0
    %320 = vmatpush.msra.mxu0 0.0
    %321 = vmatpush.msra.mxu0 0.0
    %322 = vmatpush.msra.mxu0 0.0
    %323 = vmatpush.msra.mxu0 0.0
    %324 = vmatpush.msra.mxu0 %v303
    %325 = vmatpush.msra.mxu0 %v302
    %326 = vmatmul.f32.gmra.mxu0 %v305
    %v327 = vpop.f32.mrf.mxu0
    %v328 = vadd.f32 0.0, %v327
    %329 = vmatmul.f32.gmra.mxu0 %v308
    %v330 = vpop.f32.mrf.mxu0
    %v331 = vadd.f32 0.0, %v330
    %332 = vdwg.mxu0
    %335 = vrot.lane.b32.xlu0 %v328, 32
    %v336 = vpop.permute.xlu0 %335
    %337 = vrot.lane.b32.xlu0 %v331, 32
    %v338 = vpop.permute.xlu0 %337
    %v341 = vadd.f32 %v138, %v336
    %v342 = vadd.f32 %v141, %v338
    %v343 = vperm.slane %v110, 2
    %345 = vrot.lane.b32.xlu0 %v343, 32
    %v346 = vpop.permute.xlu0 %345
    %v348 = vadd.f32 %v341, %v346
    %v349 = vadd.f32 %v342, %v346
    %v350 = vmax.f32 %v348, 0.0
    %v351 = vmax.f32 %v349, 0.0
    %vm352 = vcmask 392448
    %v353 = vsel %vm352, %v350, 0.0
    %v354 = vsel %vm352, %v351, 0.0
    %v355 = vadd.f32 %v353, %v354
    %v356 = vrot.slane %v355, 4
    %v357 = vadd.f32 %v355, %v356
    %v358 = vrot.slane %v357, 2
    %v359 = vadd.f32 %v357, %v358
    %v360 = vrot.slane %v359, 1
    %v361 = vadd.f32 %v359, %v360
    %v362 = vrcp.pop 16.0
    %v363 = vmul.f32 16.0, %v362
    %v364 = vsub.f32 1.0, %v363
    %v365 = vmul.f32 %v362, %v364
    %v366 = vadd.f32 %v362, %v365
    %vm367 = vweird.f32 %v362
    %v368 = vsel %vm367, %v362, %v366
    %v369 = vmul.f32 %v361, %v368
    %v370 = vsub.f32 %v350, %v369
    %v371 = vsub.f32 %v351, %v369
    %v372 = vmul.f32 %v370, %v370
    %v373 = vmul.f32 %v371, %v371
    %376 = vrot.lane.b32.xlu0 %v372, 96
    %v377 = vpop.permute.xlu0 %376
    %378 = vrot.lane.b32.xlu0 %v373, 96
    %v379 = vpop.permute.xlu0 %378
    %v382 = vsel %vm113, %v377, 0.0
    %383 = vadd.xlane.f32.xlu0 %v382
    %v384 = vpop.xlane.xlu0 %383
    %v385 = vsel %vm113, %v379, 0.0
    %386 = vadd.xlane.f32.xlu0 %v385
    %v387 = vpop.xlane.xlu0 %386
    %vm388 = vcmask 7168
    %v389 = vsel %vm388, %v384, 0.0
    %v390 = vsel %vm388, %v387, 0.0
    %v391 = vadd.f32 %v389, %v390
    %392 = vadd.xlane.f32.xlu0 %v391
    %v393 = vpop.xlane.xlu0 %392
    %v394 = vrot.slane %v393, 4
    %v395 = vadd.f32 %v393, %v394
    %v396 = vrot.slane %v395, 2
    %v397 = vadd.f32 %v395, %v396
    %v398 = vrot.slane %v397, 1
    %v399 = vadd.f32 %v397, %v398
    %s400 = vtos %v399
    %v401 = vrcp.pop 16.0
    %v402 = vmul.f32 16.0, %v401
    %v403 = vsub.f32 1.0, %v402
    %v404 = vmul.f32 %v401, %v403
    %v405 = vadd.f32 %v401, %v404
    %vm406 = vweird.f32 %v401
    %v407 = vsel %vm406, %v401, %v405
    %s408 = vtos %v407
    %s409 = smul.f32 %s400, %s408
    %s410 = sadd.f32 %s409, 1e-05
    %v411 = vstv %s410
    %v412 = vrsqrt.pop %v411
    %v413 = vmul.f32 %v412, %v411
    %v414 = vmul.f32 %v413, %v412
    %v415 = vmul.f32 0.5, %v414
    %v416 = vsub.f32 1.5, %v415
    %v417 = vmul.f32 %v412, %v416
    %vm418 = vweird.f32 %v411
    %vm419 = vweird.f32 %v412
    %vm420 = vmor %vm418, %vm419
    %v421 = vsel %vm420, %v412, %v417
    %s422 = vtos %v421
    %v423 = vstv %s422
    %v424 = vmul.f32 %v370, %v423
    %v425 = vmul.f32 %v371, %v423
    %s426 = scalar_lea.vmem %s9, 4
    %v427 = vld [vmem:[%s426] sm:$0x7]
    %s428 = scalar_lea.vmem %s7, 16
    %v429 = vld [vmem:[%s428] sm:$0xff]
    %v430 = vld [vmem:[%s428 + $0x8] sm:$0xff]
    %433 = vrot.lane.b32.xlu0 %v424, 96
    %v434 = vpop.permute.xlu0 %433
    %435 = vrot.lane.b32.xlu0 %v425, 96
    %v436 = vpop.permute.xlu0 %435
    %v437 = vsel %vm113, %v434, 0
    %v439 = vsel %vm113, %v436, 0
    %441 = vmatpush.msra.mxu0 0.0
    %442 = vmatpush.msra.mxu0 0.0
    %443 = vmatpush.msra.mxu0 0.0
    %444 = vmatpush.msra.mxu0 0.0
    %445 = vmatpush.msra.mxu0 0.0
    %446 = vmatpush.msra.mxu0 0.0
    %447 = vmatpush.msra.mxu0 0.0
    %448 = vmatpush.msra.mxu0 0.0
    %449 = vmatpush.msra.mxu0 0.0
    %450 = vmatpush.msra.mxu0 0.0
    %451 = vmatpush.msra.mxu0 0.0
    %452 = vmatpush.msra.mxu0 0.0
    %453 = vmatpush.msra.mxu0 0.0
    %454 = vmatpush.msra.mxu0 0.0
    %455 = vmatpush.msra.mxu0 %v430
    %456 = vmatpush.msra.mxu0 %v429
    %457 = vmatmul.f32.gmra.mxu0 %v437
    %v458 = vpop.f32.mrf.mxu0
    %v459 = vadd.f32 0.0, %v458
    %460 = vmatmul.f32.gmra.mxu0 %v439
    %v461 = vpop.f32.mrf.mxu0
    %v462 = vadd.f32 0.0, %v461
    %463 = vdwg.mxu0
    %v464 = vperm.slane %v427, 0
    %v465 = vadd.f32 %v459, %v464
    %v466 = vadd.f32 %v462, %v464
    %469 = vrot.lane.b32.xlu0 %v459, 112
    %v470 = vpop.permute.xlu0 %469
    %471 = vrot.lane.b32.xlu0 %v462, 112
    %v472 = vpop.permute.xlu0 %471
    %v475 = vpack.c.bf16 %v466, %v465
    %v476 = vpack.c.bf16 %v472, %v470
    %v477 = vperm.slane %v427, 1
    %v478 = vmul.f32 %v159, %v477
    %v479 = vmul.f32 %v164, %v477
    %v480 = vmul.f32 %v169, %v477
    %v481 = vmul.f32 %v174, %v477
    %v482 = vmul.f32 %v179, %v477
    %v483 = vmul.f32 %v184, %v477
    %v484 = vmul.f32 %v189, %v477
    %v485 = vmul.f32 %v194, %v477
    %486 = vmatpush.bf16.msra.mxu0 0
    %487 = vmatpush.bf16.msra.mxu0 0
    %488 = vmatpush.bf16.msra.mxu0 0
    %489 = vmatpush.bf16.msra.mxu0 0
    %490 = vmatpush.bf16.msra.mxu0 0
    %491 = vmatpush.bf16.msra.mxu0 0
    %492 = vmatpush.bf16.msra.mxu0 %v476
    %493 = vmatpush.bf16.msra.mxu0 %v475
    %494 = vmatmul.bf16.gmra.mxu0 %v227
    %v495 = vpop.f32.mrf.mxu0
    %v496 = vadd.f32 %v478, %v495
    %v497 = vpop.f32.mrf.mxu0
    %v498 = vadd.f32 %v479, %v497
    %499 = vmatmul.bf16.gmra.mxu0 %v230
    %v500 = vpop.f32.mrf.mxu0
    %v501 = vadd.f32 %v480, %v500
    %v502 = vpop.f32.mrf.mxu0
    %v503 = vadd.f32 %v481, %v502
    %504 = vmatmul.bf16.gmra.mxu0 %v233
    %v505 = vpop.f32.mrf.mxu0
    %v506 = vadd.f32 %v482, %v505
    %v507 = vpop.f32.mrf.mxu0
    %v508 = vadd.f32 %v483, %v507
    %509 = vmatmul.bf16.gmra.mxu0 %v236
    %v510 = vpop.f32.mrf.mxu0
    %v511 = vadd.f32 %v484, %v510
    %v512 = vpop.f32.mrf.mxu0
    %v513 = vadd.f32 %v485, %v512
    %514 = vdwg.mxu0
    %v515 = vmax.f32 %v496, 0.0
    %v516 = vmax.f32 %v498, 0.0
    %v517 = vmax.f32 %v501, 0.0
    %v518 = vmax.f32 %v503, 0.0
    %v519 = vmax.f32 %v506, 0.0
    %v520 = vmax.f32 %v508, 0.0
    %v521 = vmax.f32 %v511, 0.0
    %v522 = vmax.f32 %v513, 0.0
    %v523 = vpack.c.bf16 %v516, %v515
    %v524 = vpack.c.bf16 %v518, %v517
    %v525 = vpack.c.bf16 %v520, %v519
    %v526 = vpack.c.bf16 %v522, %v521
    %527 = vmatpush.bf16.msra.mxu0 0
    %528 = vmatpush.bf16.msra.mxu0 0
    %529 = vmatpush.bf16.msra.mxu0 0
    %530 = vmatpush.bf16.msra.mxu0 0
    %531 = vmatpush.bf16.msra.mxu0 %v526
    %532 = vmatpush.bf16.msra.mxu0 %v525
    %533 = vmatpush.bf16.msra.mxu0 %v524
    %534 = vmatpush.bf16.msra.mxu0 %v523
    %535 = vmatmul.bf16.gmra.mxu0 %v286
    %v536 = vpop.f32.mrf.mxu0
    %v537 = vadd.f32 0.0, %v536
    %v538 = vpop.f32.mrf.mxu0
    %v539 = vadd.f32 0.0, %v538
    %540 = vdwg.mxu0
    %s541 = scalar_lea.vmem %s8, 16
    %v542 = vld [vmem:[%s541] sm:$0xff]
    %v543 = vld [vmem:[%s541 + $0x8] sm:$0xff]
    %v545 = vsel %vm113, %v537, 0
    %v548 = vsel %vm113, %v539, 0
    %550 = vmatpush.msra.mxu0 0.0
    %551 = vmatpush.msra.mxu0 0.0
    %552 = vmatpush.msra.mxu0 0.0
    %553 = vmatpush.msra.mxu0 0.0
    %554 = vmatpush.msra.mxu0 0.0
    %555 = vmatpush.msra.mxu0 0.0
    %556 = vmatpush.msra.mxu0 0.0
    %557 = vmatpush.msra.mxu0 0.0
    %558 = vmatpush.msra.mxu0 0.0
    %559 = vmatpush.msra.mxu0 0.0
    %560 = vmatpush.msra.mxu0 0.0
    %561 = vmatpush.msra.mxu0 0.0
    %562 = vmatpush.msra.mxu0 0.0
    %563 = vmatpush.msra.mxu0 0.0
    %564 = vmatpush.msra.mxu0 %v543
    %565 = vmatpush.msra.mxu0 %v542
    %566 = vmatmul.f32.gmra.mxu0 %v545
    %v567 = vpop.f32.mrf.mxu0
    %v568 = vadd.f32 0.0, %v567
    %569 = vmatmul.f32.gmra.mxu0 %v548
    %v570 = vpop.f32.mrf.mxu0
    %v571 = vadd.f32 0.0, %v570
    %572 = vdwg.mxu0
    %575 = vrot.lane.b32.xlu0 %v568, 32
    %v576 = vpop.permute.xlu0 %575
    %577 = vrot.lane.b32.xlu0 %v571, 32
    %v578 = vpop.permute.xlu0 %577
    %v581 = vadd.f32 %v459, %v576
    %v582 = vadd.f32 %v462, %v578
    %v583 = vperm.slane %v427, 2
    %585 = vrot.lane.b32.xlu0 %v583, 32
    %v586 = vpop.permute.xlu0 %585
    %v588 = vadd.f32 %v581, %v586
    %v589 = vadd.f32 %v582, %v586
    %v590 = vmax.f32 %v588, 0.0
    %v591 = vmax.f32 %v589, 0.0
    %v592 = vsel %vm352, %v590, 0.0
    %v593 = vsel %vm352, %v591, 0.0
    %v594 = vadd.f32 %v592, %v593
    %v595 = vrot.slane %v594, 4
    %v596 = vadd.f32 %v594, %v595
    %v597 = vrot.slane %v596, 2
    %v598 = vadd.f32 %v596, %v597
    %v599 = vrot.slane %v598, 1
    %v600 = vadd.f32 %v598, %v599
    %v601 = vmul.f32 %v600, %v368
    %v602 = vsub.f32 %v590, %v601
    %v603 = vsub.f32 %v591, %v601
    %v604 = vmul.f32 %v602, %v602
    %v605 = vmul.f32 %v603, %v603
    %608 = vrot.lane.b32.xlu0 %v604, 96
    %v609 = vpop.permute.xlu0 %608
    %610 = vrot.lane.b32.xlu0 %v605, 96
    %v611 = vpop.permute.xlu0 %610
    %v614 = vsel %vm113, %v609, 0.0
    %615 = vadd.xlane.f32.xlu0 %v614
    %v616 = vpop.xlane.xlu0 %615
    %v617 = vsel %vm113, %v611, 0.0
    %618 = vadd.xlane.f32.xlu0 %v617
    %v619 = vpop.xlane.xlu0 %618
    %v620 = vsel %vm388, %v616, 0.0
    %v621 = vsel %vm388, %v619, 0.0
    %v622 = vadd.f32 %v620, %v621
    %623 = vadd.xlane.f32.xlu0 %v622
    %v624 = vpop.xlane.xlu0 %623
    %v625 = vrot.slane %v624, 4
    %v626 = vadd.f32 %v624, %v625
    %v627 = vrot.slane %v626, 2
    %v628 = vadd.f32 %v626, %v627
    %v629 = vrot.slane %v628, 1
    %v630 = vadd.f32 %v628, %v629
    %s631 = vtos %v630
    %v632 = vrcp.pop 16.0
    %v633 = vmul.f32 16.0, %v632
    %v634 = vsub.f32 1.0, %v633
    %v635 = vmul.f32 %v632, %v634
    %v636 = vadd.f32 %v632, %v635
    %vm637 = vweird.f32 %v632
    %v638 = vsel %vm637, %v632, %v636
    %s639 = vtos %v638
    %s640 = smul.f32 %s631, %s639
    %s641 = sadd.f32 %s640, 1e-05
    %v642 = vstv %s641
    %v643 = vrsqrt.pop %v642
    %v644 = vmul.f32 %v643, %v642
    %v645 = vmul.f32 %v644, %v643
    %v646 = vmul.f32 0.5, %v645
    %v647 = vsub.f32 1.5, %v646
    %v648 = vmul.f32 %v643, %v647
    %vm649 = vweird.f32 %v642
    %vm650 = vweird.f32 %v643
    %vm651 = vmor %vm649, %vm650
    %v652 = vsel %vm651, %v643, %v648
    %s653 = vtos %v652
    %v654 = vstv %s653
    %v655 = vmul.f32 %v602, %v654
    %v656 = vmul.f32 %v603, %v654
    %v657 = vld [vmem:[%s3] sm:$0xff]
    %v658 = vld [vmem:[%s3 + $0x8] sm:$0xff]
    %v659 = vld [vmem:[%s3 + $0x10] sm:$0xff]
    %v660 = vld [vmem:[%s3 + $0x18] sm:$0xff]
    %vm661 = vcmp.gt.f32.partialorder %v657, 0.5
    %vm662 = vcmp.gt.f32.partialorder %v658, 0.5
    %vm663 = vcmp.gt.f32.partialorder %v659, 0.5
    %vm664 = vcmp.gt.f32.partialorder %v660, 0.5
    %v665 = vsel %vm661, 1, 0
    %v666 = vsel %vm662, 1, 0
    %v667 = vsel %vm663, 1, 0
    %v668 = vsel %vm664, 1, 0
    %669 = vset.pattern.permute.xlu0 0
    %670 = vperm.xlu0 %669, %v665
    %v671 = vpop.permute.xlu0 %670
    %672 = vset.pattern.permute.xlu0 0
    %673 = vperm.xlu0 %672, %v666
    %v674 = vpop.permute.xlu0 %673
    %675 = vset.pattern.permute.xlu0 0
    %676 = vperm.xlu0 %675, %v667
    %v677 = vpop.permute.xlu0 %676
    %678 = vset.pattern.permute.xlu0 0
    %679 = vperm.xlu0 %678, %v668
    %v680 = vpop.permute.xlu0 %679
    %vm681 = vcmp.eq.s32.totalorder %v671, 1
    %vm682 = vcmp.eq.s32.totalorder %v674, 1
    %vm683 = vcmp.eq.s32.totalorder %v677, 1
    %vm684 = vcmp.eq.s32.totalorder %v680, 1
    %v685 = vsel %vm681, %v655, -1e+30
    %v686 = vsel %vm682, %v656, -1e+30
    %v687 = vsel %vm683, %v655, -1e+30
    %v688 = vsel %vm684, %v656, -1e+30
    %v689 = vsel %vm352, %v685, -inf
    %v690 = vsel %vm352, %v686, -inf
    %v691 = vmax.f32 %v689, %v690
    %v692 = vrot.slane %v691, 4
    %v693 = vmax.f32 %v691, %v692
    %v694 = vrot.slane %v693, 2
    %v695 = vmax.f32 %v693, %v694
    %v696 = vrot.slane %v695, 1
    %v697 = vmax.f32 %v695, %v696
    %v698 = vsel %vm352, %v687, -inf
    %v699 = vsel %vm352, %v688, -inf
    %v700 = vmax.f32 %v698, %v699
    %v701 = vrot.slane %v700, 4
    %v702 = vmax.f32 %v700, %v701
    %v703 = vrot.slane %v702, 2
    %v704 = vmax.f32 %v702, %v703
    %v705 = vrot.slane %v704, 1
    %v706 = vmax.f32 %v704, %v705
    %v707 = vld [vmem:[%s10] sm:$0xff]
    %v708 = vld [vmem:[%s10 + $0x8] sm:$0xff]
    %v709 = vld [vmem:[%s11] sm:$0x1]
    %v711 = vperm.slane %v709, 0
    %vm715 = vcmask 1041409
    %v716 = vsel %vm715, %v706, %v697
    %717 = vrot.lane.b32.xlu0 %v716, 96
    %v718 = vpop.permute.xlu0 %717
    %v719 = vsel %vm113, %v718, 0
    %721 = vmatpush.msra.mxu0 0.0
    %722 = vmatpush.msra.mxu0 0.0
    %723 = vmatpush.msra.mxu0 0.0
    %724 = vmatpush.msra.mxu0 0.0
    %725 = vmatpush.msra.mxu0 0.0
    %726 = vmatpush.msra.mxu0 0.0
    %727 = vmatpush.msra.mxu0 0.0
    %728 = vmatpush.msra.mxu0 0.0
    %729 = vmatpush.msra.mxu0 0.0
    %730 = vmatpush.msra.mxu0 0.0
    %731 = vmatpush.msra.mxu0 0.0
    %732 = vmatpush.msra.mxu0 0.0
    %733 = vmatpush.msra.mxu0 0.0
    %734 = vmatpush.msra.mxu0 0.0
    %735 = vmatpush.msra.mxu0 %v708
    %736 = vmatpush.msra.mxu0 %v707
    %737 = vmatmul.f32.gmra.mxu0 %v719
    %v738 = vpop.f32.mrf.mxu0
    %v739 = vadd.f32 %v711, %v738
    %740 = vdwg.mxu0
    %v741 = vmax.f32 %v739, 0.0
    %v742 = vld [vmem:[%s12] sm:$0xff]
    %v743 = vld [vmem:[%s12 + $0x8] sm:$0xff]
    %v744 = vld [vmem:[%s13] sm:$0x1]
    %v746 = vperm.slane %v744, 0
    %v749 = vsel %vm113, %v741, 0
    %751 = vmatpush.msra.mxu0 0.0
    %752 = vmatpush.msra.mxu0 0.0
    %753 = vmatpush.msra.mxu0 0.0
    %754 = vmatpush.msra.mxu0 0.0
    %755 = vmatpush.msra.mxu0 0.0
    %756 = vmatpush.msra.mxu0 0.0
    %757 = vmatpush.msra.mxu0 0.0
    %758 = vmatpush.msra.mxu0 0.0
    %759 = vmatpush.msra.mxu0 0.0
    %760 = vmatpush.msra.mxu0 0.0
    %761 = vmatpush.msra.mxu0 0.0
    %762 = vmatpush.msra.mxu0 0.0
    %763 = vmatpush.msra.mxu0 0.0
    %764 = vmatpush.msra.mxu0 0.0
    %765 = vmatpush.msra.mxu0 %v743
    %766 = vmatpush.msra.mxu0 %v742
    %767 = vmatmul.f32.gmra.mxu0 %v749
    %v768 = vpop.f32.mrf.mxu0
    %v769 = vadd.f32 %v746, %v768
    %770 = vdwg.mxu0
    %vm771 = vcmask 9216
    %772 = vst.msk [vmem:[#allocation2] sm:$0x3] %vm771, %v769
    // Predicated region
    $region58: #{mp_gi_forward.1} parent=1 // pred_check
      _
    $region59: #{mp_gi_forward.1} parent=1 // pred_check_branch
      %774 = sbr.rel (0) target = $region61
    $region60: #{mp_gi_forward.1} parent=1 // pred_region
      %776 = vsyncadd [#allocation3], 0
      %s778 = sshll.u32 [#allocation2], 4
      %s779 = int_to_ptr.vmem [resolvable:$true] %s778
      %s780 = sshll.u32 %s14, 4
      %s781 = int_to_ptr.hbm [resolvable:$true] %s780
      %783 = dma.vmem_to_hbm [thread:$0]  %s779, 32, %s781, [#allocation3]
    $region61: #{mp_gi_forward.1} parent=1 // pred_fallthru
      _
    // Predicated region
    $region62: #{mp_gi_forward.1} parent=1 // pred_check
      _
    $region63: #{mp_gi_forward.1} parent=1 // pred_check_branch
      %785 = sbr.rel (0) target = $region65
    $region64: #{mp_gi_forward.1} parent=1 // pred_region
      %787 = dma.done [#allocation3], 32
    $region65: #{mp_gi_forward.1} parent=1 // pred_fallthru
      _
    %788 = vsyncpa [#allocation3], 1

</llo_original>
